<compile_context>
chip_gen: v6e
topology: v6e:2x2x1
jax: 0.10.0
libtpu: 0.0.40
codegen_flags: <defaults>
</compile_context>

<pallas_src>
import functools
import math

import jax
import jax.numpy as jnp
from jax.experimental import pallas as pl
from jax.experimental.pallas import tpu as pltpu

_LANE = 128


def _dc_ce_kernel(x_ref, t_ref, tp_ref, ps_ref, cnt_ref, ce_ref, *,
                  hw_valid, needs_mask):
    """One grid step over a (C, TN) tile of logits and (1, TN) tile of labels.

    Lane-dense partial accumulators (per class x 128 lane positions):
      tp_ref  (C,128): sum of softmax prob at the target class
      ps_ref  (C,128): sum of softmax prob over all pixels   -> fp = ps - tp
      cnt_ref (C,128): count of pixels with label == class   -> fn = cnt - tp
      ce_ref  (1,128): sum of (logsumexp - logit_at_target)
    """
    i = pl.program_id(1)        # pixel-tile index (reduction axis, innermost)

    @pl.when(i == 0)
    def _():
        tp_ref[...] = jnp.zeros_like(tp_ref)
        ps_ref[...] = jnp.zeros_like(ps_ref)
        cnt_ref[...] = jnp.zeros_like(cnt_ref)
        ce_ref[...] = jnp.zeros_like(ce_ref)

    x = x_ref[...].astype(jnp.float32)      # (C, TN) logits
    t = t_ref[...]                          # (1, TN) int32 labels
    C, TN = x.shape

    if needs_mask:
        pos = i * TN + jax.lax.broadcasted_iota(jnp.int32, (1, TN), 1)
        valid = pos < hw_valid
        maskf = valid.astype(jnp.float32)
        x = jnp.where(valid, x, 0.0)        # sanitize ragged / OOB lanes

    # Stable softmax over the class (sublane) axis: one reciprocal per pixel.
    m = jnp.max(x, axis=0, keepdims=True)           # (1, TN)
    e = jnp.exp(x - m)                              # (C, TN)
    s = jnp.sum(e, axis=0, keepdims=True)           # (1, TN)
    inv_s = pl.reciprocal(s, approx=False)          # exact: keeps 1e-5 tolerance
    p = e * inv_s                                   # (C, TN)

    cls = jax.lax.broadcasted_iota(jnp.int32, x.shape, 0)
    ohf = (cls == t).astype(jnp.float32)            # one-hot target (C, TN)
    if needs_mask:
        p = p * maskf
        ohf = ohf * maskf

    x_t = jnp.sum(x * ohf, axis=0, keepdims=True)   # (1, TN) logit at target
    lse = m + jnp.log(s)                            # (1, TN)
    ce_c = lse - x_t
    if needs_mask:
        ce_c = ce_c * maskf

    tp_c = p * ohf                                  # (C, TN)

    # Fold TN lanes down to 128 lane-dense partials with pure VPU adds
    # (no XLU lane reductions, no narrow masked stores per grid step).
    k_chunks = TN // _LANE

    def fold(a):
        out = a[:, 0:_LANE]
        for k in range(1, k_chunks):
            out = out + a[:, k * _LANE:(k + 1) * _LANE]
        return out

    tp_ref[...] += fold(tp_c)
    ps_ref[...] += fold(p)
    cnt_ref[...] += fold(ohf)
    ce_ref[...] += fold(ce_c)


@functools.partial(jax.jit,
                   static_argnames=("weight_ce", "weight_dice", "smooth", "tile_n"))
def dc_and_ce_loss(net_output, target, *, weight_ce=1.0, weight_dice=1.0,
                   smooth=1e-5, tile_n=8192):
    """net_output: (B, C, *spatial) float logits; target: (B, 1, *spatial) int labels."""
    B, C = net_output.shape[:2]
    HW = math.prod(net_output.shape[2:])

    # Free reshape only (no transpose, no pad -> no extra HBM round trip);
    # logits stay in their original dtype (cast to f32 inside the kernel).
    x = net_output.reshape(B, C, HW)
    t = target.reshape(B, 1, HW).astype(jnp.int32)

    hw_ceil = ((HW + _LANE - 1) // _LANE) * _LANE
    tile = max(_LANE, (min(tile_n, hw_ceil) // _LANE) * _LANE)
    num_tiles = pl.cdiv(HW, tile)
    # Last tile may extend past HW (partially OOB block read) -> mask in kernel.
    needs_mask = (num_tiles * tile != HW)

    kernel = functools.partial(_dc_ce_kernel, hw_valid=HW, needs_mask=needs_mask)

    out_shapes = (
        jax.ShapeDtypeStruct((B, C, _LANE), jnp.float32),   # tp partials
        jax.ShapeDtypeStruct((B, C, _LANE), jnp.float32),   # sum(p) partials
        jax.ShapeDtypeStruct((B, C, _LANE), jnp.float32),   # one-hot count partials
        jax.ShapeDtypeStruct((B, 1, _LANE), jnp.float32),   # CE partials
    )
    acc_c = pl.BlockSpec((None, C, _LANE), lambda b, i: (b, 0, 0))
    acc_1 = pl.BlockSpec((None, 1, _LANE), lambda b, i: (b, 0, 0))

    tp_p, ps_p, cnt_p, ce_p = pl.pallas_call(
        kernel,
        out_shape=out_shapes,
        grid_spec=pltpu.PrefetchScalarGridSpec(
            num_scalar_prefetch=0,
            grid=(B, num_tiles),
            in_specs=[
                pl.BlockSpec((None, C, tile), lambda b, i: (b, 0, i)),
                pl.BlockSpec((None, 1, tile), lambda b, i: (b, 0, i)),
            ],
            out_specs=(acc_c, acc_c, acc_c, acc_1),
        ),
        compiler_params=pltpu.CompilerParams(
            # batch axis is independent (shards across TCs on v7x);
            # pixel-tile axis is the reduction.
            dimension_semantics=("parallel", "arbitrary")),
    )(x, t)

    # Tiny final reductions in JAX glue.
    tp = jnp.sum(tp_p, axis=(0, 2))       # (C,)
    ps = jnp.sum(ps_p, axis=(0, 2))
    cnt = jnp.sum(cnt_p, axis=(0, 2))
    ce_sum = jnp.sum(ce_p)

    fp = ps - tp
    fn = cnt - tp

    # SoftDiceLoss tail (batch_dice=True, do_bg=False)
    nominator = 2.0 * tp + smooth
    denominator = jnp.clip(2.0 * tp + fp + fn + smooth, 1e-8, None)
    dc = nominator / denominator
    dc_loss = -jnp.mean(dc[1:])           # drop background class

    # RobustCrossEntropyLoss with reduction='mean' over all B*H*W pixels
    ce_loss = ce_sum / (B * HW)

    # TODO(synk): ignore_label branch of DC_and_CE_loss is not implemented
    # (module instantiated with ignore_label=None, as in the default config).
    return weight_ce * ce_loss + weight_dice * dc_loss


def _reference(net_output, target, *, smooth=1e-5):
    """Plain-JAX reference mirroring the PyTorch module."""
    B, C, H, W = net_output.shape
    logits = net_output.astype(jnp.float32)
    p = jax.nn.softmax(logits, axis=1)
    oh = jax.nn.one_hot(target[:, 0], C, axis=1, dtype=jnp.float32)  # (B,C,H,W)
    axes = (0, 2, 3)
    tp = jnp.sum(p * oh, axes)
    fp = jnp.sum(p * (1.0 - oh), axes)
    fn = jnp.sum((1.0 - p) * oh, axes)
    dc = (2 * tp + smooth) / jnp.clip(2 * tp + fp + fn + smooth, 1e-8, None)
    dc_loss = -jnp.mean(dc[1:])
    logp = jax.nn.log_softmax(logits, axis=1)
    ce_loss = -jnp.mean(jnp.take_along_axis(logp, target, axis=1))
    return ce_loss + dc_loss


if __name__ == "__main__":
    key = jax.random.PRNGKey(0)
    k1, k2 = jax.random.split(key)

    B, C, H, W = 2, 4, 16, 16
    net_output = jax.random.normal(k1, (B, C, H, W), dtype=jnp.float32)
    target = jax.random.randint(k2, (B, 1, H, W), 0, C, dtype=jnp.int32)

    out = dc_and_ce_loss(net_output, target)
    out = jax.block_until_ready(out)

    ref = _reference(net_output, target)
    assert jnp.allclose(out, ref, rtol=1e-5, atol=1e-5), (out, ref)

    print("KERNEL_OK")
</pallas_src>

<mosaic_0001>
module attributes {stable_mosaic.version = 11 : i64} {
  func.func @_dc_ce_kernel(%arg0: i32, %arg1: i32, %arg2: memref<1x4x256xf32, #tpu.memory_space<vmem>>, %arg3: memref<1x1x256xi32, #tpu.memory_space<vmem>>, %arg4: memref<1x4x128xf32, #tpu.memory_space<vmem>>, %arg5: memref<1x4x128xf32, #tpu.memory_space<vmem>>, %arg6: memref<1x4x128xf32, #tpu.memory_space<vmem>>, %arg7: memref<1x1x128xf32, #tpu.memory_space<vmem>>) attributes {dimension_semantics = [#tpu.dimension_semantics<parallel>, #tpu.dimension_semantics<arbitrary>], iteration_bounds = array<i64: 2, 1>, scalar_prefetch = 0 : i64, scratch_operands = 0 : i64, tpu.core_type = #tpu.core_type<tc>, window_params = [{transform_indices = @transform_0, window_bounds = array<i64: 1, 4, 256>}, {transform_indices = @transform_1, window_bounds = array<i64: 1, 1, 256>}, {transform_indices = @transform_2, window_bounds = array<i64: 1, 4, 128>}, {transform_indices = @transform_3, window_bounds = array<i64: 1, 4, 128>}, {transform_indices = @transform_4, window_bounds = array<i64: 1, 4, 128>}, {transform_indices = @transform_5, window_bounds = array<i64: 1, 1, 128>}]} {
    %c0_i32 = arith.constant 0 : i32
    %0 = arith.cmpi eq, %arg1, %c0_i32 : i32
    %1 = arith.extui %0 : i1 to i32
    %c0_i32_0 = arith.constant 0 : i32
    %2 = arith.cmpi ne, %1, %c0_i32_0 : i32
    scf.if %2 {
      %cst_32 = arith.constant 0.000000e+00 : f32
      %65 = vector.broadcast %cst_32 : f32 to vector<4x128xf32>
      %c0_33 = arith.constant 0 : index
      %c0_34 = arith.constant 0 : index
      %c0_35 = arith.constant 0 : index
      %66 = vector.load %arg4[%c0_33, %c0_34, %c0_35] : memref<1x4x128xf32, #tpu.memory_space<vmem>>, vector<1x4x128xf32>
      %67 = vector.shape_cast %66 : vector<1x4x128xf32> to vector<4x128xf32>
      %68 = vector.shape_cast %65 : vector<4x128xf32> to vector<1x4x128xf32>
      tpu.vector_store %arg4[%c0_33, %c0_34, %c0_35], %68 {strides = array<i32>} : memref<1x4x128xf32, #tpu.memory_space<vmem>>, vector<1x4x128xf32>,
      %cst_36 = arith.constant 0.000000e+00 : f32
      %69 = vector.broadcast %cst_36 : f32 to vector<4x128xf32>
      %c0_37 = arith.constant 0 : index
      %c0_38 = arith.constant 0 : index
      %c0_39 = arith.constant 0 : index
      %70 = vector.load %arg5[%c0_37, %c0_38, %c0_39] : memref<1x4x128xf32, #tpu.memory_space<vmem>>, vector<1x4x128xf32>
      %71 = vector.shape_cast %70 : vector<1x4x128xf32> to vector<4x128xf32>
      %72 = vector.shape_cast %69 : vector<4x128xf32> to vector<1x4x128xf32>
      tpu.vector_store %arg5[%c0_37, %c0_38, %c0_39], %72 {strides = array<i32>} : memref<1x4x128xf32, #tpu.memory_space<vmem>>, vector<1x4x128xf32>,
      %cst_40 = arith.constant 0.000000e+00 : f32
      %73 = vector.broadcast %cst_40 : f32 to vector<4x128xf32>
      %c0_41 = arith.constant 0 : index
      %c0_42 = arith.constant 0 : index
      %c0_43 = arith.constant 0 : index
      %74 = vector.load %arg6[%c0_41, %c0_42, %c0_43] : memref<1x4x128xf32, #tpu.memory_space<vmem>>, vector<1x4x128xf32>
      %75 = vector.shape_cast %74 : vector<1x4x128xf32> to vector<4x128xf32>
      %76 = vector.shape_cast %73 : vector<4x128xf32> to vector<1x4x128xf32>
      tpu.vector_store %arg6[%c0_41, %c0_42, %c0_43], %76 {strides = array<i32>} : memref<1x4x128xf32, #tpu.memory_space<vmem>>, vector<1x4x128xf32>,
      %cst_44 = arith.constant 0.000000e+00 : f32
      %77 = vector.broadcast %cst_44 : f32 to vector<1x128xf32>
      %c0_45 = arith.constant 0 : index
      %c0_46 = arith.constant 0 : index
      %c0_47 = arith.constant 0 : index
      %78 = vector.load %arg7[%c0_45, %c0_46, %c0_47] : memref<1x1x128xf32, #tpu.memory_space<vmem>>, vector<1x1x128xf32>
      %79 = vector.shape_cast %78 : vector<1x1x128xf32> to vector<1x128xf32>
      %80 = vector.shape_cast %77 : vector<1x128xf32> to vector<1x1x128xf32>
      tpu.vector_store %arg7[%c0_45, %c0_46, %c0_47], %80 {strides = array<i32>} : memref<1x1x128xf32, #tpu.memory_space<vmem>>, vector<1x1x128xf32>,
    } else {
    }
    %c0 = arith.constant 0 : index
    %c0_1 = arith.constant 0 : index
    %c0_2 = arith.constant 0 : index
    %3 = vector.load %arg2[%c0, %c0_1, %c0_2] : memref<1x4x256xf32, #tpu.memory_space<vmem>>, vector<1x4x256xf32>
    %4 = vector.shape_cast %3 : vector<1x4x256xf32> to vector<4x256xf32>
    %c0_3 = arith.constant 0 : index
    %c0_4 = arith.constant 0 : index
    %c0_5 = arith.constant 0 : index
    %5 = vector.load %arg3[%c0_3, %c0_4, %c0_5] : memref<1x1x256xi32, #tpu.memory_space<vmem>>, vector<1x1x256xi32>
    %6 = vector.shape_cast %5 : vector<1x1x256xi32> to vector<1x256xi32>
    %cst = arith.constant dense<0xFF800000> : vector<256xf32>
    %7 = vector.multi_reduction <maximumf>, %4, %cst [0] : vector<4x256xf32> to vector<256xf32>
    %8 = vector.shape_cast %7 : vector<256xf32> to vector<1x256xf32>
    %9 = vector.broadcast %8 : vector<1x256xf32> to vector<4x256xf32>
    %10 = arith.subf %4, %9 : vector<4x256xf32>
    %11 = math.exp %10 : vector<4x256xf32>
    %cst_6 = arith.constant dense<0.000000e+00> : vector<256xf32>
    %12 = vector.multi_reduction <add>, %11, %cst_6 [0] : vector<4x256xf32> to vector<256xf32>
    %13 = vector.shape_cast %12 : vector<256xf32> to vector<1x256xf32>
    %14 = tpu.reciprocal %13 : vector<1x256xf32> -> vector<1x256xf32>
    %15 = vector.broadcast %14 : vector<1x256xf32> to vector<4x256xf32>
    %16 = arith.mulf %11, %15 : vector<4x256xf32>
    %17 = tpu.iota {dimensions = array<i32: 0>} : vector<4x256xi32>
    %18 = vector.broadcast %6 : vector<1x256xi32> to vector<4x256xi32>
    %19 = arith.cmpi eq, %17, %18 : vector<4x256xi32>
    %20 = arith.extui %19 : vector<4x256xi1> to vector<4x256xi32>
    %21 = arith.sitofp %20 : vector<4x256xi32> to vector<4x256xf32>
    %22 = arith.mulf %4, %21 : vector<4x256xf32>
    %cst_7 = arith.constant dense<0.000000e+00> : vector<256xf32>
    %23 = vector.multi_reduction <add>, %22, %cst_7 [0] : vector<4x256xf32> to vector<256xf32>
    %24 = vector.shape_cast %23 : vector<256xf32> to vector<1x256xf32>
    %25 = math.log %13 : vector<1x256xf32>
    %26 = arith.addf %8, %25 : vector<1x256xf32>
    %27 = arith.subf %26, %24 : vector<1x256xf32>
    %28 = arith.mulf %16, %21 : vector<4x256xf32>
    %c0_8 = arith.constant 0 : index
    %c0_9 = arith.constant 0 : index
    %c0_10 = arith.constant 0 : index
    %29 = vector.load %arg4[%c0_8, %c0_9, %c0_10] : memref<1x4x128xf32, #tpu.memory_space<vmem>>, vector<1x4x128xf32>
    %30 = vector.shape_cast %29 : vector<1x4x128xf32> to vector<4x128xf32>
    %31 = vector.extract_strided_slice %28 {offsets = [0, 0], sizes = [4, 128], strides = [1, 1]} : vector<4x256xf32> to vector<4x128xf32>
    %32 = vector.extract_strided_slice %28 {offsets = [0, 128], sizes = [4, 128], strides = [1, 1]} : vector<4x256xf32> to vector<4x128xf32>
    %33 = arith.addf %31, %32 : vector<4x128xf32>
    %34 = arith.addf %30, %33 : vector<4x128xf32>
    %c0_11 = arith.constant 0 : index
    %c0_12 = arith.constant 0 : index
    %c0_13 = arith.constant 0 : index
    %35 = vector.load %arg4[%c0_11, %c0_12, %c0_13] : memref<1x4x128xf32, #tpu.memory_space<vmem>>, vector<1x4x128xf32>
    %36 = vector.shape_cast %35 : vector<1x4x128xf32> to vector<4x128xf32>
    %37 = vector.shape_cast %34 : vector<4x128xf32> to vector<1x4x128xf32>
    tpu.vector_store %arg4[%c0_11, %c0_12, %c0_13], %37 {strides = array<i32>} : memref<1x4x128xf32, #tpu.memory_space<vmem>>, vector<1x4x128xf32>,
    %c0_14 = arith.constant 0 : index
    %c0_15 = arith.constant 0 : index
    %c0_16 = arith.constant 0 : index
    %38 = vector.load %arg5[%c0_14, %c0_15, %c0_16] : memref<1x4x128xf32, #tpu.memory_space<vmem>>, vector<1x4x128xf32>
    %39 = vector.shape_cast %38 : vector<1x4x128xf32> to vector<4x128xf32>
    %40 = vector.extract_strided_slice %16 {offsets = [0, 0], sizes = [4, 128], strides = [1, 1]} : vector<4x256xf32> to vector<4x128xf32>
    %41 = vector.extract_strided_slice %16 {offsets = [0, 128], sizes = [4, 128], strides = [1, 1]} : vector<4x256xf32> to vector<4x128xf32>
    %42 = arith.addf %40, %41 : vector<4x128xf32>
    %43 = arith.addf %39, %42 : vector<4x128xf32>
    %c0_17 = arith.constant 0 : index
    %c0_18 = arith.constant 0 : index
    %c0_19 = arith.constant 0 : index
    %44 = vector.load %arg5[%c0_17, %c0_18, %c0_19] : memref<1x4x128xf32, #tpu.memory_space<vmem>>, vector<1x4x128xf32>
    %45 = vector.shape_cast %44 : vector<1x4x128xf32> to vector<4x128xf32>
    %46 = vector.shape_cast %43 : vector<4x128xf32> to vector<1x4x128xf32>
    tpu.vector_store %arg5[%c0_17, %c0_18, %c0_19], %46 {strides = array<i32>} : memref<1x4x128xf32, #tpu.memory_space<vmem>>, vector<1x4x128xf32>,
    %c0_20 = arith.constant 0 : index
    %c0_21 = arith.constant 0 : index
    %c0_22 = arith.constant 0 : index
    %47 = vector.load %arg6[%c0_20, %c0_21, %c0_22] : memref<1x4x128xf32, #tpu.memory_space<vmem>>, vector<1x4x128xf32>
    %48 = vector.shape_cast %47 : vector<1x4x128xf32> to vector<4x128xf32>
    %49 = vector.extract_strided_slice %21 {offsets = [0, 0], sizes = [4, 128], strides = [1, 1]} : vector<4x256xf32> to vector<4x128xf32>
    %50 = vector.extract_strided_slice %21 {offsets = [0, 128], sizes = [4, 128], strides = [1, 1]} : vector<4x256xf32> to vector<4x128xf32>
    %51 = arith.addf %49, %50 : vector<4x128xf32>
    %52 = arith.addf %48, %51 : vector<4x128xf32>
    %c0_23 = arith.constant 0 : index
    %c0_24 = arith.constant 0 : index
    %c0_25 = arith.constant 0 : index
    %53 = vector.load %arg6[%c0_23, %c0_24, %c0_25] : memref<1x4x128xf32, #tpu.memory_space<vmem>>, vector<1x4x128xf32>
    %54 = vector.shape_cast %53 : vector<1x4x128xf32> to vector<4x128xf32>
    %55 = vector.shape_cast %52 : vector<4x128xf32> to vector<1x4x128xf32>
    tpu.vector_store %arg6[%c0_23, %c0_24, %c0_25], %55 {strides = array<i32>} : memref<1x4x128xf32, #tpu.memory_space<vmem>>, vector<1x4x128xf32>,
    %c0_26 = arith.constant 0 : index
    %c0_27 = arith.constant 0 : index
    %c0_28 = arith.constant 0 : index
    %56 = vector.load %arg7[%c0_26, %c0_27, %c0_28] : memref<1x1x128xf32, #tpu.memory_space<vmem>>, vector<1x1x128xf32>
    %57 = vector.shape_cast %56 : vector<1x1x128xf32> to vector<1x128xf32>
    %58 = vector.extract_strided_slice %27 {offsets = [0, 0], sizes = [1, 128], strides = [1, 1]} : vector<1x256xf32> to vector<1x128xf32>
    %59 = vector.extract_strided_slice %27 {offsets = [0, 128], sizes = [1, 128], strides = [1, 1]} : vector<1x256xf32> to vector<1x128xf32>
    %60 = arith.addf %58, %59 : vector<1x128xf32>
    %61 = arith.addf %57, %60 : vector<1x128xf32>
    %c0_29 = arith.constant 0 : index
    %c0_30 = arith.constant 0 : index
    %c0_31 = arith.constant 0 : index
    %62 = vector.load %arg7[%c0_29, %c0_30, %c0_31] : memref<1x1x128xf32, #tpu.memory_space<vmem>>, vector<1x1x128xf32>
    %63 = vector.shape_cast %62 : vector<1x1x128xf32> to vector<1x128xf32>
    %64 = vector.shape_cast %61 : vector<1x128xf32> to vector<1x1x128xf32>
    tpu.vector_store %arg7[%c0_29, %c0_30, %c0_31], %64 {strides = array<i32>} : memref<1x1x128xf32, #tpu.memory_space<vmem>>, vector<1x1x128xf32>,
    return
  }
  func.func @transform_0(%arg0: i32, %arg1: i32) -> (i32, i32, i32) {
    %c0_i32 = arith.constant 0 : i32
    %c0_i32_0 = arith.constant 0 : i32
    return %arg0, %c0_i32, %arg1 : i32, i32, i32
  }
  func.func @transform_1(%arg0: i32, %arg1: i32) -> (i32, i32, i32) {
    %c0_i32 = arith.constant 0 : i32
    %c0_i32_0 = arith.constant 0 : i32
    return %arg0, %c0_i32, %arg1 : i32, i32, i32
  }
  func.func @transform_2(%arg0: i32, %arg1: i32) -> (i32, i32, i32) {
    %c0_i32 = arith.constant 0 : i32
    %c0_i32_0 = arith.constant 0 : i32
    %c0_i32_1 = arith.constant 0 : i32
    return %arg0, %c0_i32, %c0_i32_0 : i32, i32, i32
  }
  func.func @transform_3(%arg0: i32, %arg1: i32) -> (i32, i32, i32) {
    %c0_i32 = arith.constant 0 : i32
    %c0_i32_0 = arith.constant 0 : i32
    %c0_i32_1 = arith.constant 0 : i32
    return %arg0, %c0_i32, %c0_i32_0 : i32, i32, i32
  }
  func.func @transform_4(%arg0: i32, %arg1: i32) -> (i32, i32, i32) {
    %c0_i32 = arith.constant 0 : i32
    %c0_i32_0 = arith.constant 0 : i32
    %c0_i32_1 = arith.constant 0 : i32
    return %arg0, %c0_i32, %c0_i32_0 : i32, i32, i32
  }
  func.func @transform_5(%arg0: i32, %arg1: i32) -> (i32, i32, i32) {
    %c0_i32 = arith.constant 0 : i32
    %c0_i32_0 = arith.constant 0 : i32
    %c0_i32_1 = arith.constant 0 : i32
    return %arg0, %c0_i32, %c0_i32_0 : i32, i32, i32
  }
}

</mosaic_0001>

<llo_original>
// kernel: dc_and_ce_loss.1
$region0: #{dc_and_ce_loss.1}
  #allocation0 [shape = 'u32[]', space=smem, size = 0x4, offset = 0x4, fixed_abs, tag = 'smem constant byte address 0x4 - core index']
  #allocation1 [shape = 'u32[144,128]{1,0:T(1,128)}', space=vmem, size = 0x12000, scoped, tag = 'internal scratch']
  %s0 = inlined_call_operand.vmem [shape: f32[2,4,256], index: 0, kind: input, shape index: {}]
  %s1 = inlined_call_operand.vmem [shape: s32[2,1,256], index: 1, kind: input, shape index: {}]
  %s2 = inlined_call_operand.vmem [shape: f32[2,4,128], index: 2, kind: output, shape index: {0}]
  %s3 = inlined_call_operand.vmem [shape: f32[2,4,128], index: 3, kind: output, shape index: {1}]
  %s4 = inlined_call_operand.vmem [shape: f32[2,4,128], index: 4, kind: output, shape index: {2}]
  %s5 = inlined_call_operand.vmem [shape: f32[2,1,128], index: 5, kind: output, shape index: {3}]
  %6 = xla_tuple %s2, %s3, %s4, %s5
  %s7 = sld [smem:[#allocation0]]
  $region69: #{dc_and_ce_loss.1} parent=0
    _
  %s9 = ssub.s32 1, %s7
  %s10 = scalar_select 0, %s9, %s7
  loop: start=0, step=1, limit=4
  $region2: #{dc_and_ce_loss.1} parent=0 // loop_pre_header
    _
  $region3: #{dc_and_ce_loss.1} parent=0 // loop_header
    %s12 = sphi 0, %s16
    %p13 = scmp.ge.s32.totalorder %s12, 4
    %s19 = sphi 0, %s31
    %s20 = sphi 0, %s27
    %s21 = sphi 0, %s19
    %s22 = sphi 0, %s20
    %s23 = sphi 0, %s21
    %s24 = sphi 0, %s22
    %s36 = sphi 0, %s38
    %s39 = sphi 0, %s36
    %s40 = sphi 0, %s39
    %s56 = sphi 0, %s40
    %s64 = sphi 0, %s66
    %s67 = sphi 0, %s64
    %s68 = sphi 0, %s67
    %s84 = sphi 0, %s68
    %s90 = sphi 0, %s92
    %s93 = sphi 0, %s90
    %s94 = sphi 0, %s93
    %s110 = sphi 0, %s94
    %s116 = sphi 0, %s118
    %s119 = sphi 0, %s116
    %s120 = sphi 0, %s119
    %s136 = sphi 0, %s120
    %s142 = sphi 0, %s144
    %s145 = sphi 0, %s142
    %s146 = sphi 0, %s145
    %s162 = sphi 0, %s146
    %s168 = sphi 0, %s170
    %s171 = sphi 0, %s168
    %s172 = sphi 0, %s171
    %s188 = sphi 0, %s172
  $region4: #{dc_and_ce_loss.1} parent=0 // loop_header_branch
    %15 = sbr.rel (%p13) target = $region8
  $region5: #{dc_and_ce_loss.1} parent=0 // loop_body
    %s17 = ssub.s32 %s12, 1
    %s18 = ssub.s32 %s12, 2
    %s25 = sadd.s32 1, %s20
    %p26 = scmp.ge.s32.totalorder %s25, 1
    %s27 = scalar_select %p26, 0, %s25
    %s28 = sadd.s32 1, %s19
    %s29 = scalar_select %p26, %s28, %s19
    %p30 = scmp.ge.s32.totalorder %s29, 2
    %s31 = scalar_select %p30, 0, %s29
    %s32 = ssub.s32 %s19, %s31
    %s33 = ssub.s32 %s20, %s27
    %s34 = sor.u32 %s32, %s33
    %p35 = scmp.eq.s32.totalorder %s34, 0
    %s37 = sadd.s32 %s36, 1
    %s38 = scalar_select %p35, %s36, %s37
    %p41 = pneg %p35
    %p42 = scmp.eq.s32.totalorder %s12, 1
    %p43 = por %p41, %p42
    %p44 = scmp.ne.s32.totalorder %s36, %s39
    %p45 = scmp.eq.s32.totalorder %s12, 0
    %p46 = por %p44, %p45
    %p47 = scmp.ne.s32.totalorder %s36, %s39
    %p48 = scmp.eq.s32.totalorder %s17, 1
    %p49 = por %p47, %p48
    %p50 = scmp.ne.s32.totalorder %s39, %s40
    %p51 = scmp.eq.s32.totalorder %s17, 0
    %p52 = por %p50, %p51
    %p53 = scmp.ne.s32.totalorder %s39, %s40
    %p54 = scmp.eq.s32.totalorder %s18, 1
    %p55 = por %p53, %p54
    %p57 = scmp.ne.s32.totalorder %s40, %s56
    %p58 = scmp.eq.s32.totalorder %s18, 0
    %p59 = por %p57, %p58
    %s60 = ssub.s32 %s19, %s31
    %s61 = ssub.s32 %s20, %s27
    %s62 = sor.u32 %s60, %s61
    %p63 = scmp.eq.s32.totalorder %s62, 0
    %s65 = sadd.s32 %s64, 1
    %s66 = scalar_select %p63, %s64, %s65
    %p69 = pneg %p63
    %p70 = scmp.eq.s32.totalorder %s12, 1
    %p71 = por %p69, %p70
    %p72 = scmp.ne.s32.totalorder %s64, %s67
    %p73 = scmp.eq.s32.totalorder %s12, 0
    %p74 = por %p72, %p73
    %p75 = scmp.ne.s32.totalorder %s64, %s67
    %p76 = scmp.eq.s32.totalorder %s17, 1
    %p77 = por %p75, %p76
    %p78 = scmp.ne.s32.totalorder %s67, %s68
    %p79 = scmp.eq.s32.totalorder %s17, 0
    %p80 = por %p78, %p79
    %p81 = scmp.ne.s32.totalorder %s67, %s68
    %p82 = scmp.eq.s32.totalorder %s18, 1
    %p83 = por %p81, %p82
    %p85 = scmp.ne.s32.totalorder %s68, %s84
    %p86 = scmp.eq.s32.totalorder %s18, 0
    %p87 = por %p85, %p86
    %s88 = ssub.s32 %s19, %s31
    %p89 = scmp.eq.s32.totalorder %s88, 0
    %s91 = sadd.s32 %s90, 1
    %s92 = scalar_select %p89, %s90, %s91
    %p95 = pneg %p89
    %p96 = scmp.eq.s32.totalorder %s12, 1
    %p97 = por %p95, %p96
    %p98 = scmp.ne.s32.totalorder %s90, %s93
    %p99 = scmp.eq.s32.totalorder %s12, 0
    %p100 = por %p98, %p99
    %p101 = scmp.ne.s32.totalorder %s90, %s93
    %p102 = scmp.eq.s32.totalorder %s17, 1
    %p103 = por %p101, %p102
    %p104 = scmp.ne.s32.totalorder %s93, %s94
    %p105 = scmp.eq.s32.totalorder %s17, 0
    %p106 = por %p104, %p105
    %p107 = scmp.ne.s32.totalorder %s93, %s94
    %p108 = scmp.eq.s32.totalorder %s18, 1
    %p109 = por %p107, %p108
    %p111 = scmp.ne.s32.totalorder %s94, %s110
    %p112 = scmp.eq.s32.totalorder %s18, 0
    %p113 = por %p111, %p112
    %s114 = ssub.s32 %s19, %s31
    %p115 = scmp.eq.s32.totalorder %s114, 0
    %s117 = sadd.s32 %s116, 1
    %s118 = scalar_select %p115, %s116, %s117
    %p121 = pneg %p115
    %p122 = scmp.eq.s32.totalorder %s12, 1
    %p123 = por %p121, %p122
    %p124 = scmp.ne.s32.totalorder %s116, %s119
    %p125 = scmp.eq.s32.totalorder %s12, 0
    %p126 = por %p124, %p125
    %p127 = scmp.ne.s32.totalorder %s116, %s119
    %p128 = scmp.eq.s32.totalorder %s17, 1
    %p129 = por %p127, %p128
    %p130 = scmp.ne.s32.totalorder %s119, %s120
    %p131 = scmp.eq.s32.totalorder %s17, 0
    %p132 = por %p130, %p131
    %p133 = scmp.ne.s32.totalorder %s119, %s120
    %p134 = scmp.eq.s32.totalorder %s18, 1
    %p135 = por %p133, %p134
    %p137 = scmp.ne.s32.totalorder %s120, %s136
    %p138 = scmp.eq.s32.totalorder %s18, 0
    %p139 = por %p137, %p138
    %s140 = ssub.s32 %s19, %s31
    %p141 = scmp.eq.s32.totalorder %s140, 0
    %s143 = sadd.s32 %s142, 1
    %s144 = scalar_select %p141, %s142, %s143
    %p147 = pneg %p141
    %p148 = scmp.eq.s32.totalorder %s12, 1
    %p149 = por %p147, %p148
    %p150 = scmp.ne.s32.totalorder %s142, %s145
    %p151 = scmp.eq.s32.totalorder %s12, 0
    %p152 = por %p150, %p151
    %p153 = scmp.ne.s32.totalorder %s142, %s145
    %p154 = scmp.eq.s32.totalorder %s17, 1
    %p155 = por %p153, %p154
    %p156 = scmp.ne.s32.totalorder %s145, %s146
    %p157 = scmp.eq.s32.totalorder %s17, 0
    %p158 = por %p156, %p157
    %p159 = scmp.ne.s32.totalorder %s145, %s146
    %p160 = scmp.eq.s32.totalorder %s18, 1
    %p161 = por %p159, %p160
    %p163 = scmp.ne.s32.totalorder %s146, %s162
    %p164 = scmp.eq.s32.totalorder %s18, 0
    %p165 = por %p163, %p164
    %s166 = ssub.s32 %s19, %s31
    %p167 = scmp.eq.s32.totalorder %s166, 0
    %s169 = sadd.s32 %s168, 1
    %s170 = scalar_select %p167, %s168, %s169
    %p173 = pneg %p167
    %p174 = scmp.eq.s32.totalorder %s12, 1
    %p175 = por %p173, %p174
    %p176 = scmp.ne.s32.totalorder %s168, %s171
    %p177 = scmp.eq.s32.totalorder %s12, 0
    %p178 = por %p176, %p177
    %p179 = scmp.ne.s32.totalorder %s168, %s171
    %p180 = scmp.eq.s32.totalorder %s17, 1
    %p181 = por %p179, %p180
    %p182 = scmp.ne.s32.totalorder %s171, %s172
    %p183 = scmp.eq.s32.totalorder %s17, 0
    %p184 = por %p182, %p183
    %p185 = scmp.ne.s32.totalorder %s171, %s172
    %p186 = scmp.eq.s32.totalorder %s18, 1
    %p187 = por %p185, %p186
    %p189 = scmp.ne.s32.totalorder %s172, %s188
    %p190 = scmp.eq.s32.totalorder %s18, 0
    %p191 = por %p189, %p190
    %p192 = scmp.le.s32.totalorder 1, %s12
    %p193 = scmp.lt.s32.totalorder %s12, 3
    %p194 = pnand %p192, %p193
    %p195 = pneg %p194
    // Predicated region
    $region9: #{dc_and_ce_loss.1} parent=5 // pred_check
      _
    $region10: #{dc_and_ce_loss.1} parent=5 // pred_check_branch
      %197 = sbr.rel (%p194) target = $region12
    $region11: #{dc_and_ce_loss.1} parent=5 // pred_region
      %s198 = ssub.s32 %s12, 1
    $region12: #{dc_and_ce_loss.1} parent=5 // pred_fallthru
      _
    %p199 = scmp.lt.s32.totalorder %s12, 2
    // Predicated region
    $region13: #{dc_and_ce_loss.1} parent=5 // pred_check
      %p200 = pneg %p199
    $region14: #{dc_and_ce_loss.1} parent=5 // pred_check_branch
      %202 = sbr.rel (%p200) target = $region16
    $region15: #{dc_and_ce_loss.1} parent=5 // pred_region
      // Predicated region
      $region17: #{dc_and_ce_loss.1} parent=15 // pred_check
        %p203 = pneg %p46
      $region18: #{dc_and_ce_loss.1} parent=15 // pred_check_branch
        %205 = sbr.rel (%p203) target = $region20
      $region19: #{dc_and_ce_loss.1} parent=15 // pred_region
        %s206 = smul.u32 2, %s20
        %p207 = scmp.lt.s32.totalorder %s19, 1
        %s208 = scalar_select %p207, %s19, 1
        %p209 = scmp.lt.s32.totalorder %s206, 1
        %s210 = scalar_select %p209, %s206, 1
        %s211 = smul.addr %s208, 2
        %s212 = sadd.s32 %s210, %s211
        %s213 = smul.addr %s212, 4
        %s214 = scalar_lea.vmem %s0, %s213
        %s215 = smul.u32 2, %s20
      $region20: #{dc_and_ce_loss.1} parent=15 // pred_fallthru
        _
      // Predicated region
      $region21: #{dc_and_ce_loss.1} parent=15 // pred_check
        %p216 = pneg %p74
      $region22: #{dc_and_ce_loss.1} parent=15 // pred_check_branch
        %218 = sbr.rel (%p216) target = $region24
      $region23: #{dc_and_ce_loss.1} parent=15 // pred_region
        %s219 = smul.u32 2, %s20
        %p220 = scmp.lt.s32.totalorder %s19, 1
        %s221 = scalar_select %p220, %s19, 1
        %p222 = scmp.lt.s32.totalorder %s219, 1
        %s223 = scalar_select %p222, %s219, 1
        %s224 = smul.addr %s221, 2
        %s225 = sadd.s32 %s223, %s224
        %s226 = scalar_lea.vmem %s1, %s225
        %s227 = smul.u32 2, %s20
      $region24: #{dc_and_ce_loss.1} parent=15 // pred_fallthru
        _
    $region16: #{dc_and_ce_loss.1} parent=5 // pred_fallthru
      _
    %p228 = scmp.le.s32.totalorder 1, %s12
    %p229 = scmp.lt.s32.totalorder %s12, 3
    %p230 = pnand %p228, %p229
    %p231 = pneg %p230
    // Predicated region
    $region25: #{dc_and_ce_loss.1} parent=5 // pred_check
      _
    $region26: #{dc_and_ce_loss.1} parent=5 // pred_check_branch
      %233 = sbr.rel (%p230) target = $region28
    $region27: #{dc_and_ce_loss.1} parent=5 // pred_region
      %s234 = ssub.s32 %s12, 1
      %s235 = smul.u32 2, %s22
      %p236 = scmp.lt.s32.totalorder %s21, 1
      %s237 = scalar_select %p236, %s21, 1
      %p238 = scmp.lt.s32.totalorder %s235, 1
      %s239 = scalar_select %p238, %s235, 1
      %s240 = smul.addr %s237, 2
      %s241 = sadd.s32 %s239, %s240
      %s242 = smul.addr %s241, 4
      %s243 = scalar_lea.vmem %s0, %s242
      %p244 = pneg %p52
      %p245 = pneg %p49
      %s246 = smul.u32 2, %s22
      %p247 = scmp.lt.s32.totalorder %s21, 1
      %s248 = scalar_select %p247, %s21, 1
      %p249 = scmp.lt.s32.totalorder %s246, 1
      %s250 = scalar_select %p249, %s246, 1
      %s251 = smul.addr %s248, 2
      %s252 = sadd.s32 %s250, %s251
      %s253 = scalar_lea.vmem %s1, %s252
      %p254 = pneg %p80
      %p255 = pneg %p77
      %p256 = pneg %p106
      %p257 = pneg %p103
      %p258 = scmp.lt.s32.totalorder %s21, 1
      %s259 = scalar_select %p258, %s21, 1
      %s260 = smul.addr %s259, 4
      %s261 = scalar_lea.vmem %s2, %s260
      %p262 = pneg %p132
      %p263 = pneg %p129
      %p264 = scmp.lt.s32.totalorder %s21, 1
      %s265 = scalar_select %p264, %s21, 1
      %s266 = smul.addr %s265, 4
      %s267 = scalar_lea.vmem %s3, %s266
      %p268 = pneg %p158
      %p269 = pneg %p155
      %p270 = scmp.lt.s32.totalorder %s21, 1
      %s271 = scalar_select %p270, %s21, 1
      %s272 = smul.addr %s271, 4
      %s273 = scalar_lea.vmem %s4, %s272
      %p274 = pneg %p184
      %p275 = pneg %p181
      %p276 = scmp.lt.s32.totalorder %s21, 1
      %s277 = scalar_select %p276, %s21, 1
      %s278 = scalar_lea.vmem %s5, %s277
      %s279 = smul.u32 2, %s22
      %p280 = scmp.lt.s32.totalorder %s21, 1
      %s281 = scalar_select %p280, %s21, 1
      %p282 = scmp.lt.s32.totalorder %s279, 1
      %s283 = scalar_select %p282, %s279, 1
      %s284 = smul.addr %s281, 2
      %s285 = sadd.s32 %s283, %s284
      %s286 = smul.addr %s285, 4
      %s287 = scalar_lea.vmem %s0, %s286
      %s288 = smul.u32 2, %s22
      %s289 = smul.u32 2, %s22
      %p290 = scmp.lt.s32.totalorder %s21, 1
      %s291 = scalar_select %p290, %s21, 1
      %p292 = scmp.lt.s32.totalorder %s289, 1
      %s293 = scalar_select %p292, %s289, 1
      %s294 = smul.addr %s291, 2
      %s295 = sadd.s32 %s293, %s294
      %s296 = scalar_lea.vmem %s1, %s295
      %s297 = smul.u32 2, %s22
      %p298 = scmp.lt.s32.totalorder %s21, 1
      %s299 = scalar_select %p298, %s21, 1
      %s300 = smul.addr %s299, 4
      %s301 = scalar_lea.vmem %s2, %s300
      %p302 = scmp.lt.s32.totalorder %s21, 1
      %s303 = scalar_select %p302, %s21, 1
      %s304 = smul.addr %s303, 4
      %s305 = scalar_lea.vmem %s3, %s304
      %p306 = scmp.lt.s32.totalorder %s21, 1
      %s307 = scalar_select %p306, %s21, 1
      %s308 = smul.addr %s307, 4
      %s309 = scalar_lea.vmem %s4, %s308
      %p310 = scmp.lt.s32.totalorder %s21, 1
      %s311 = scalar_select %p310, %s21, 1
      %s312 = scalar_lea.vmem %s5, %s311
      %p313 = scmp.eq.s32.totalorder %s22, 0
      // Predicated region
      $region29: #{dc_and_ce_loss.1} parent=27 // pred_check
        %p314 = pneg %p313
      $region30: #{dc_and_ce_loss.1} parent=27 // pred_check_branch
        %316 = sbr.rel (%p314) target = $region32
      $region31: #{dc_and_ce_loss.1} parent=27 // pred_region
        %317 = vst [vmem:[%s301] sm:$0xf] 0.0
        %318 = vst [vmem:[%s305] sm:$0xf] 0.0
        %319 = vst [vmem:[%s309] sm:$0xf] 0.0
        %320 = vst [vmem:[%s312] sm:$0x1] 0.0
      $region32: #{dc_and_ce_loss.1} parent=27 // pred_fallthru
        _
      %v321 = vld [vmem:[%s287] sm:$0xff]
      %v322 = vld [vmem:[%s296] sm:$0x3]
      %v324 = vcombine.high %v321, %v321
      %vm326 = vcmask 1043456
      %v327 = vsel %vm326, %v321, -inf
      %v328 = vrot.slane %v327, 4
      %v329 = vmax.f32 %v327, %v328
      %v330 = vrot.slane %v329, 2
      %v331 = vmax.f32 %v329, %v330
      %v332 = vrot.slane %v331, 1
      %v333 = vmax.f32 %v331, %v332
      %v334 = vsel %vm326, %v324, -inf
      %v335 = vrot.slane %v334, 4
      %v336 = vmax.f32 %v334, %v335
      %v337 = vrot.slane %v336, 2
      %v338 = vmax.f32 %v336, %v337
      %v339 = vrot.slane %v338, 1
      %v340 = vmax.f32 %v338, %v339
      %v343 = vcombine.low %v333, %v340
      %v345 = vsub.f32 %v321, %v343
      %v346 = vmul.f32 %v345, 1.442695
      %v347 = vpow.pop %v346
      %v349 = vcombine.high %v347, %v347
      %v351 = vsel %vm326, %v347, 0.0
      %v352 = vrot.slane %v351, 4
      %v353 = vadd.f32 %v351, %v352
      %v354 = vrot.slane %v353, 2
      %v355 = vadd.f32 %v353, %v354
      %v356 = vrot.slane %v355, 1
      %v357 = vadd.f32 %v355, %v356
      %v358 = vsel %vm326, %v349, 0.0
      %v359 = vrot.slane %v358, 4
      %v360 = vadd.f32 %v358, %v359
      %v361 = vrot.slane %v360, 2
      %v362 = vadd.f32 %v360, %v361
      %v363 = vrot.slane %v362, 1
      %v364 = vadd.f32 %v362, %v363
      %v365 = vrcp.pop %v357
      %v366 = vrcp.pop %v364
      %v369 = vcombine.low %v365, %v366
      %v371 = vmul.f32 %v347, %v369
      %v372 = vlaneseq
      %v373 = vshrl.u32 %v372, 7
      %v374 = vlaneseq
      %v375 = vshrl.u32 %v374, 7
      %v376 = vsub.s32 0, %v375
      %v377 = vrot.slane %v322, %v376
      %v378 = vlaneseq
      %v379 = vshrl.u32 %v378, 7
      %v380 = vsub.s32 1, %v379
      %v381 = vrot.slane %v322, %v380
      %vm382 = vcmp.eq.s32.totalorder %v373, %v377
      %vm383 = vcmp.eq.s32.totalorder %v373, %v381
      %v384 = vsel %vm382, 1, 0
      %v385 = vsel %vm383, 1, 0
      %v386 = vcvt.s32.f32 %v384
      %v387 = vcvt.s32.f32 %v385
      %v390 = vcombine.low %v386, %v387
      %v392 = vmul.f32 %v321, %v390
      %v394 = vcombine.high %v392, %v392
      %v396 = vsel %vm326, %v392, 0.0
      %v397 = vrot.slane %v396, 4
      %v398 = vadd.f32 %v396, %v397
      %v399 = vrot.slane %v398, 2
      %v400 = vadd.f32 %v398, %v399
      %v401 = vrot.slane %v400, 1
      %v402 = vadd.f32 %v400, %v401
      %v403 = vsel %vm326, %v394, 0.0
      %v404 = vrot.slane %v403, 4
      %v405 = vadd.f32 %v403, %v404
      %v406 = vrot.slane %v405, 2
      %v407 = vadd.f32 %v405, %v406
      %v408 = vrot.slane %v407, 1
      %v409 = vadd.f32 %v407, %v408
      %v410 = vlog2.pop %v357
      %v411 = vmul.f32 %v410, 0.6931472
      %v412 = vlog2.pop %v364
      %v413 = vmul.f32 %v412, 0.6931472
      %v414 = vadd.f32 %v333, %v411
      %v415 = vadd.f32 %v340, %v413
      %v416 = vsub.f32 %v414, %v402
      %v417 = vsub.f32 %v415, %v409
      %v418 = vmul.f32 %v371, %v390
      %v419 = vld [vmem:[%s301] sm:$0xf]
      %v421 = vrot.slane %v418, 4
      %v423 = vadd.f32 %v418, %v421
      %v424 = vadd.f32 %v419, %v423
      %425 = vst [vmem:[%s301] sm:$0xf] %v424
      %v426 = vld [vmem:[%s305] sm:$0xf]
      %v428 = vrot.slane %v371, 4
      %v430 = vadd.f32 %v371, %v428
      %v431 = vadd.f32 %v426, %v430
      %432 = vst [vmem:[%s305] sm:$0xf] %v431
      %v433 = vld [vmem:[%s309] sm:$0xf]
      %v434 = vadd.f32 %v386, %v387
      %v435 = vadd.f32 %v433, %v434
      %436 = vst [vmem:[%s309] sm:$0xf] %v435
      %v437 = vld [vmem:[%s312] sm:$0x1]
      %v438 = vadd.f32 %v416, %v417
      %v439 = vadd.f32 %v437, %v438
      %440 = vst [vmem:[%s312] sm:$0x1] %v439
      %p441 = scmp.lt.s32.totalorder %s21, 1
      %s442 = scalar_select %p441, %s21, 1
      %s443 = smul.addr %s442, 4
      %s444 = scalar_lea.vmem %s2, %s443
      %p445 = scmp.lt.s32.totalorder %s21, 1
      %s446 = scalar_select %p445, %s21, 1
      %s447 = smul.addr %s446, 4
      %s448 = scalar_lea.vmem %s3, %s447
      %p449 = scmp.lt.s32.totalorder %s21, 1
      %s450 = scalar_select %p449, %s21, 1
      %s451 = smul.addr %s450, 4
      %s452 = scalar_lea.vmem %s4, %s451
      %p453 = scmp.lt.s32.totalorder %s21, 1
      %s454 = scalar_select %p453, %s21, 1
      %s455 = scalar_lea.vmem %s5, %s454
      // Predicated region
      $region33: #{dc_and_ce_loss.1} parent=27 // pred_check
        %p456 = pneg %p103
      $region34: #{dc_and_ce_loss.1} parent=27 // pred_check_branch
        %458 = sbr.rel (%p456) target = $region36
      $region35: #{dc_and_ce_loss.1} parent=27 // pred_region
        _
      $region36: #{dc_and_ce_loss.1} parent=27 // pred_fallthru
        _
      // Predicated region
      $region37: #{dc_and_ce_loss.1} parent=27 // pred_check
        %p459 = pneg %p129
      $region38: #{dc_and_ce_loss.1} parent=27 // pred_check_branch
        %461 = sbr.rel (%p459) target = $region40
      $region39: #{dc_and_ce_loss.1} parent=27 // pred_region
        _
      $region40: #{dc_and_ce_loss.1} parent=27 // pred_fallthru
        _
      // Predicated region
      $region41: #{dc_and_ce_loss.1} parent=27 // pred_check
        %p462 = pneg %p155
      $region42: #{dc_and_ce_loss.1} parent=27 // pred_check_branch
        %464 = sbr.rel (%p462) target = $region44
      $region43: #{dc_and_ce_loss.1} parent=27 // pred_region
        _
      $region44: #{dc_and_ce_loss.1} parent=27 // pred_fallthru
        _
      // Predicated region
      $region45: #{dc_and_ce_loss.1} parent=27 // pred_check
        %p465 = pneg %p181
      $region46: #{dc_and_ce_loss.1} parent=27 // pred_check_branch
        %467 = sbr.rel (%p465) target = $region48
      $region47: #{dc_and_ce_loss.1} parent=27 // pred_region
        _
      $region48: #{dc_and_ce_loss.1} parent=27 // pred_fallthru
        _
    $region28: #{dc_and_ce_loss.1} parent=5 // pred_fallthru
      _
    %p468 = scmp.le.s32.totalorder 2, %s12
    // Predicated region
    $region49: #{dc_and_ce_loss.1} parent=5 // pred_check
      %p469 = pneg %p468
    $region50: #{dc_and_ce_loss.1} parent=5 // pred_check_branch
      %471 = sbr.rel (%p469) target = $region52
    $region51: #{dc_and_ce_loss.1} parent=5 // pred_region
      %s472 = ssub.s32 %s12, 2
      // Predicated region
      $region53: #{dc_and_ce_loss.1} parent=51 // pred_check
        %p473 = pneg %p109
      $region54: #{dc_and_ce_loss.1} parent=51 // pred_check_branch
        %475 = sbr.rel (%p473) target = $region56
      $region55: #{dc_and_ce_loss.1} parent=51 // pred_region
        %p476 = scmp.lt.s32.totalorder %s23, 1
        %s477 = scalar_select %p476, %s23, 1
        %s478 = smul.addr %s477, 4
        %s479 = scalar_lea.vmem %s2, %s478
      $region56: #{dc_and_ce_loss.1} parent=51 // pred_fallthru
        _
      // Predicated region
      $region57: #{dc_and_ce_loss.1} parent=51 // pred_check
        %p480 = pneg %p135
      $region58: #{dc_and_ce_loss.1} parent=51 // pred_check_branch
        %482 = sbr.rel (%p480) target = $region60
      $region59: #{dc_and_ce_loss.1} parent=51 // pred_region
        %p483 = scmp.lt.s32.totalorder %s23, 1
        %s484 = scalar_select %p483, %s23, 1
        %s485 = smul.addr %s484, 4
        %s486 = scalar_lea.vmem %s3, %s485
      $region60: #{dc_and_ce_loss.1} parent=51 // pred_fallthru
        _
      // Predicated region
      $region61: #{dc_and_ce_loss.1} parent=51 // pred_check
        %p487 = pneg %p161
      $region62: #{dc_and_ce_loss.1} parent=51 // pred_check_branch
        %489 = sbr.rel (%p487) target = $region64
      $region63: #{dc_and_ce_loss.1} parent=51 // pred_region
        %p490 = scmp.lt.s32.totalorder %s23, 1
        %s491 = scalar_select %p490, %s23, 1
        %s492 = smul.addr %s491, 4
        %s493 = scalar_lea.vmem %s4, %s492
      $region64: #{dc_and_ce_loss.1} parent=51 // pred_fallthru
        _
      // Predicated region
      $region65: #{dc_and_ce_loss.1} parent=51 // pred_check
        %p494 = pneg %p187
      $region66: #{dc_and_ce_loss.1} parent=51 // pred_check_branch
        %496 = sbr.rel (%p494) target = $region68
      $region67: #{dc_and_ce_loss.1} parent=51 // pred_region
        %p497 = scmp.lt.s32.totalorder %s23, 1
        %s498 = scalar_select %p497, %s23, 1
        %s499 = scalar_lea.vmem %s5, %s498
      $region68: #{dc_and_ce_loss.1} parent=51 // pred_fallthru
        _
    $region52: #{dc_and_ce_loss.1} parent=5 // pred_fallthru
      _
  $region6: #{dc_and_ce_loss.1} parent=0 // loop_footer
    %s16 = sadd.s32 1, %s12
  $region7: #{dc_and_ce_loss.1} parent=0 // loop_footer_branch
    %11 = sbr.rel target = $region3
  $region8: #{dc_and_ce_loss.1} parent=0 // loop_exit
    _

</llo_original>
